<compile_context>
chip_gen: v7x
topology: tpu7x:2x2x1
jax: 0.10.0
libtpu: 0.0.40
codegen_flags: <defaults>
</compile_context>

<pallas_src>
import functools

import jax
import jax.numpy as jnp
from jax.experimental import pallas as pl
from jax.experimental.pallas import tpu as pltpu

BN_EPS = 1e-5


# --------------------------------------------------------------------------
# In-kernel helper: masked 3x3 depthwise conv on a lane-dense (C, H*W) tile.
# Only 4 pltpu.roll's:  2 column shifts + 2 row shifts of the per-row partial
# sums (weights are position-independent, so rows can be combined pre-shift).
# --------------------------------------------------------------------------
def _dw3x3_dense(y, wdw, masks, W, HW):
    """y: (C, HW) activations, flat index p = i*W + j.
    wdw: (C, 9) per-channel weights, (kh, kw) row-major, BN scale pre-folded.
    masks: (4, HW) f32 border masks [j>0, j<W-1, i>0, i<H-1]."""
    cl = masks[0:1, :]   # column j > 0      (left neighbor valid)
    cr = masks[1:2, :]   # column j < W - 1  (right neighbor valid)
    ru = masks[2:3, :]   # row    i > 0      (upper row valid)
    rd = masks[3:4, :]   # row    i < H - 1  (lower row valid)

    # z_m1[p] = y[p-1] (left neighbor), z_p1[p] = y[p+1] (right neighbor).
    z_m1 = pltpu.roll(y, shift=1, axis=1) * cl
    z_p1 = pltpu.roll(y, shift=HW - 1, axis=1) * cr

    # Per-kernel-row partial sums (weights laid out kh-major, kw-minor).
    s_m1 = wdw[:, 0:1] * z_m1 + wdw[:, 1:2] * y + wdw[:, 2:3] * z_p1   # kh = 0
    s_0 = wdw[:, 3:4] * z_m1 + wdw[:, 4:5] * y + wdw[:, 5:6] * z_p1    # kh = 1
    s_p1 = wdw[:, 6:7] * z_m1 + wdw[:, 7:8] * y + wdw[:, 8:9] * z_p1   # kh = 2

    # out[p] = s_m1[p - W]*[i>0] + s_0[p] + s_p1[p + W]*[i<H-1]
    top = pltpu.roll(s_m1, shift=W, axis=1) * ru
    bot = pltpu.roll(s_p1, shift=HW - W, axis=1) * rd
    return top + s_0 + bot


# --------------------------------------------------------------------------
# Fused kernels (one pallas_call per forward)
# --------------------------------------------------------------------------
def _kernel_s1(x_ref, mask_ref, w1_ref, b1_ref, wdw_ref, b2_ref, w2_ref, b3_ref,
               o_ref, *, W, HW, bf):
    """stride == 1: x1 passthrough + branch2, output pre-shuffled."""
    m = mask_ref[...]
    x1 = x_ref[:bf, :]                                   # passthrough -> group 0
    x2 = x_ref[bf:, :]                                   # branch2 input
    # pw1 (BN scale folded) + shift + ReLU  (bf16 MXU operands, f32 accumulate)
    y1 = jnp.dot(w1_ref[...], x2.astype(jnp.bfloat16),
                 preferred_element_type=jnp.float32)
    y1 = jnp.maximum(y1 + b1_ref[...], 0.0)
    # 3x3 depthwise + BN shift (no ReLU between BN2 and pw2 in the module)
    y2 = _dw3x3_dense(y1, wdw_ref[...], m, W, HW) + b2_ref[...]
    # pw2 + shift + ReLU
    y3 = jnp.dot(w2_ref[...], y2.astype(jnp.bfloat16),
                 preferred_element_type=jnp.float32)
    y3 = jnp.maximum(y3 + b3_ref[...], 0.0)
    # pre-shuffled store: group 0 lanes [0,HW) = x1, group 1 lanes [HW,2HW) = y3
    o_ref[:, :HW] = x1
    o_ref[:, HW:] = y3


def _kernel_s2(x_ref, mask_ref, s_ref,
               dw1_ref, c1_ref, pw1_ref, d1_ref,
               w1_ref, b1_ref, wdw_ref, b2_ref, w2_ref, b3_ref,
               o_ref, *, W, HW, OutHW):
    """stride > 1: branch1 + branch2 fused, subsample-before-pw2, pre-shuffled."""
    m = mask_ref[...]
    x = x_ref[...]
    S = s_ref[...]                                       # (HW, OutHW) 0/1 bf16
    # ---- branch1: dw3x3(stride) -> BN -> 1x1 -> BN -> ReLU -------------------
    a2 = _dw3x3_dense(x, dw1_ref[...], m, W, HW) + c1_ref[...]
    a2s = jnp.dot(a2.astype(jnp.bfloat16), S, preferred_element_type=jnp.float32)
    a3 = jnp.dot(pw1_ref[...], a2s.astype(jnp.bfloat16),
                 preferred_element_type=jnp.float32)
    a3 = jnp.maximum(a3 + d1_ref[...], 0.0)
    # ---- branch2: 1x1 -> BN -> ReLU -> dw3x3(stride) -> BN -> 1x1 -> BN -> ReLU
    y1 = jnp.dot(w1_ref[...], x.astype(jnp.bfloat16),
                 preferred_element_type=jnp.float32)
    y1 = jnp.maximum(y1 + b1_ref[...], 0.0)
    y2 = _dw3x3_dense(y1, wdw_ref[...], m, W, HW) + b2_ref[...]
    y2s = jnp.dot(y2.astype(jnp.bfloat16), S, preferred_element_type=jnp.float32)
    y3 = jnp.dot(w2_ref[...], y2s.astype(jnp.bfloat16),
                 preferred_element_type=jnp.float32)
    y3 = jnp.maximum(y3 + b3_ref[...], 0.0)
    # pre-shuffled store: group 0 = branch1, group 1 = branch2
    o_ref[:, :OutHW] = a3
    o_ref[:, OutHW:] = y3


# --------------------------------------------------------------------------
# Wrapper-side glue (metadata-only reshapes + tiny constant tables)
# --------------------------------------------------------------------------
def _bn_fold(bn):
    scale = bn["gamma"] / jnp.sqrt(bn["var"] + BN_EPS)
    shift = bn["beta"] - bn["mean"] * scale
    return scale, shift


def _dw_masks(H, W):
    idx = jnp.arange(H * W)
    j = idx % W
    i = idx // W
    return jnp.stack([j > 0, j < W - 1, i > 0, i < H - 1]).astype(jnp.float32)


def _subsample_matrix(H, W, stride):
    """(H*W, Ho*Wo) 0/1 selection matrix picking centers (s*oi, s*oj)."""
    Ho = (H - 1) // stride + 1
    Wo = (W - 1) // stride + 1
    rows = jnp.arange(Ho) * stride
    cols = jnp.arange(Wo) * stride
    p = (rows[:, None] * W + cols[None, :]).reshape(-1)
    S = jnp.zeros((H * W, Ho * Wo), jnp.float32)
    S = S.at[p, jnp.arange(Ho * Wo)].set(1.0)
    return S


def inverted_residual_forward(x_nchw, params, stride):
    """Matches InvertedResidual.forward (NCHW in / NCHW out).  One pallas_call;
    concat + channel_shuffle(2) are realized by the pre-shuffled output layout,
    so the trailing reshape is metadata-only."""
    N, C, H, W = x_nchw.shape
    HW = H * W
    assert HW % 128 == 0, "lane-dense layout needs H*W to be a multiple of 128"
    xf = x_nchw.reshape(N, C, HW)            # metadata-only
    masks = _dw_masks(H, W)
    fixed = lambda n: (0, 0)

    if stride == 1:
        bf = C // 2
        p = params["branch2"]
        s1, b1 = _bn_fold(p["bn1"])
        s2, b2 = _bn_fold(p["bn2"])
        s3, b3 = _bn_fold(p["bn3"])
        w1 = (p["pw1_w"].reshape(bf, bf) * s1[:, None]).astype(jnp.bfloat16)
        wdw = p["dw_w"].reshape(bf, 9) * s2[:, None]
        w2 = (p["pw2_w"].reshape(bf, bf) * s3[:, None]).astype(jnp.bfloat16)

        out = pl.pallas_call(
            functools.partial(_kernel_s1, W=W, HW=HW, bf=bf),
            out_shape=jax.ShapeDtypeStruct((N, bf, 2 * HW), jnp.float32),
            grid=(N,),
            in_specs=[
                pl.BlockSpec((None, C, HW), lambda n: (n, 0, 0)),
                pl.BlockSpec((4, HW), fixed),
                pl.BlockSpec((bf, bf), fixed),
                pl.BlockSpec((bf, 1), fixed),
                pl.BlockSpec((bf, 9), fixed),
                pl.BlockSpec((bf, 1), fixed),
                pl.BlockSpec((bf, bf), fixed),
                pl.BlockSpec((bf, 1), fixed),
            ],
            out_specs=pl.BlockSpec((None, bf, 2 * HW), lambda n: (n, 0, 0)),
            compiler_params=pltpu.CompilerParams(
                dimension_semantics=("parallel",)),
        )(xf, masks, w1, b1[:, None], wdw, b2[:, None], w2, b3[:, None])
        # (N, bf, 2*HW) -> (N, 2*bf, H, W) is the shuffled layout, metadata-only.
        return out.reshape(N, 2 * bf, H, W)

    # ---- stride > 1 : both branches in one kernel ----------------------------
    inp = C
    bf = params["branch2"]["pw1_w"].shape[0]
    Ho = (H - 1) // stride + 1
    Wo = (W - 1) // stride + 1
    OutHW = Ho * Wo
    S = _subsample_matrix(H, W, stride).astype(jnp.bfloat16)

    p1 = params["branch1"]
    p2 = params["branch2"]
    sa1, ba1 = _bn_fold(p1["bn1"])
    sa2, ba2 = _bn_fold(p1["bn2"])
    dw1 = p1["dw_w"].reshape(inp, 9) * sa1[:, None]
    pw1b1 = (p1["pw_w"].reshape(bf, inp) * sa2[:, None]).astype(jnp.bfloat16)
    s1, b1 = _bn_fold(p2["bn1"])
    s2, b2 = _bn_fold(p2["bn2"])
    s3, b3 = _bn_fold(p2["bn3"])
    w1 = (p2["pw1_w"].reshape(bf, inp) * s1[:, None]).astype(jnp.bfloat16)
    wdw = p2["dw_w"].reshape(bf, 9) * s2[:, None]
    w2 = (p2["pw2_w"].reshape(bf, bf) * s3[:, None]).astype(jnp.bfloat16)

    out = pl.pallas_call(
        functools.partial(_kernel_s2, W=W, HW=HW, OutHW=OutHW),
        out_shape=jax.ShapeDtypeStruct((N, bf, 2 * OutHW), jnp.float32),
        grid=(N,),
        in_specs=[
            pl.BlockSpec((None, inp, HW), lambda n: (n, 0, 0)),
            pl.BlockSpec((4, HW), fixed),
            pl.BlockSpec((HW, OutHW), fixed),
            pl.BlockSpec((inp, 9), fixed),
            pl.BlockSpec((inp, 1), fixed),
            pl.BlockSpec((bf, inp), fixed),
            pl.BlockSpec((bf, 1), fixed),
            pl.BlockSpec((bf, inp), fixed),
            pl.BlockSpec((bf, 1), fixed),
            pl.BlockSpec((bf, 9), fixed),
            pl.BlockSpec((bf, 1), fixed),
            pl.BlockSpec((bf, bf), fixed),
            pl.BlockSpec((bf, 1), fixed),
        ],
        out_specs=pl.BlockSpec((None, bf, 2 * OutHW), lambda n: (n, 0, 0)),
        compiler_params=pltpu.CompilerParams(
            dimension_semantics=("parallel",)),
    )(xf, masks, S,
      dw1, ba1[:, None], pw1b1, ba2[:, None],
      w1, b1[:, None], wdw, b2[:, None], w2, b3[:, None])
    # (N, bf, 2*OutHW) -> (N, 2*bf, Ho, Wo) is the shuffled layout, metadata-only.
    return out.reshape(N, 2 * bf, Ho, Wo)


# --------------------------------------------------------------------------
# Parameter setup (deterministic, torch-shaped)
# --------------------------------------------------------------------------
def _init_bn(key, c):
    k1, k2, k3, k4 = jax.random.split(key, 4)
    return {
        "gamma": jax.random.uniform(k1, (c,), jnp.float32, 0.5, 1.5),
        "beta": jax.random.normal(k2, (c,), jnp.float32) * 0.1,
        "mean": jax.random.normal(k3, (c,), jnp.float32) * 0.1,
        "var": jax.random.uniform(k4, (c,), jnp.float32, 0.5, 1.5),
    }


def _init_conv(key, cout, cin, k):
    # torch Conv2d weight layout: (Cout, Cin/groups, kh, kw)
    return jax.random.normal(key, (cout, cin, k, k), jnp.float32) * 0.2


def init_params(key, inp, oup, stride):
    bf = oup // 2
    keys = jax.random.split(key, 10)
    params = {}
    if stride > 1:
        params["branch1"] = {
            "dw_w": _init_conv(keys[0], inp, 1, 3),
            "bn1": _init_bn(keys[1], inp),
            "pw_w": _init_conv(keys[2], bf, inp, 1),
            "bn2": _init_bn(keys[3], bf),
        }
    cin2 = inp if stride > 1 else bf
    params["branch2"] = {
        "pw1_w": _init_conv(keys[4], bf, cin2, 1),
        "bn1": _init_bn(keys[5], bf),
        "dw_w": _init_conv(keys[6], bf, 1, 3),
        "bn2": _init_bn(keys[7], bf),
        "pw2_w": _init_conv(keys[8], bf, bf, 1),
        "bn3": _init_bn(keys[9], bf),
    }
    return params


# --------------------------------------------------------------------------
# Pure-JAX (XLA conv, HIGHEST precision) reference for validation
# --------------------------------------------------------------------------
def _ref_bn(x, bn):
    g = bn["gamma"][None, :, None, None]
    b = bn["beta"][None, :, None, None]
    m = bn["mean"][None, :, None, None]
    v = bn["var"][None, :, None, None]
    return (x - m) / jnp.sqrt(v + BN_EPS) * g + b


def _ref_conv(x, w, s=1, pad=0, groups=1):
    return jax.lax.conv_general_dilated(
        x, w, (s, s), [(pad, pad), (pad, pad)],
        dimension_numbers=("NCHW", "OIHW", "NCHW"),
        feature_group_count=groups,
        precision=jax.lax.Precision.HIGHEST)


def ref_forward(x, params, stride):
    def branch2(x):
        p = params["branch2"]
        y = jnp.maximum(_ref_bn(_ref_conv(x, p["pw1_w"]), p["bn1"]), 0.0)
        c = p["dw_w"].shape[0]
        y = _ref_bn(_ref_conv(y, p["dw_w"], s=stride, pad=1, groups=c), p["bn2"])
        y = jnp.maximum(_ref_bn(_ref_conv(y, p["pw2_w"]), p["bn3"]), 0.0)
        return y

    def branch1(x):
        p = params["branch1"]
        c = p["dw_w"].shape[0]
        y = _ref_bn(_ref_conv(x, p["dw_w"], s=stride, pad=1, groups=c), p["bn1"])
        y = jnp.maximum(_ref_bn(_ref_conv(y, p["pw_w"]), p["bn2"]), 0.0)
        return y

    if stride == 1:
        c = x.shape[1] // 2
        out = jnp.concatenate([x[:, :c], branch2(x[:, c:])], axis=1)
    else:
        out = jnp.concatenate([branch1(x), branch2(x)], axis=1)
    N, C, H, W = out.shape
    out = out.reshape(N, 2, C // 2, H, W).swapaxes(1, 2).reshape(N, C, H, W)
    return out


# --------------------------------------------------------------------------
if __name__ == "__main__":
    key = jax.random.PRNGKey(0)
    kx1, kx2, kp1, kp2 = jax.random.split(key, 4)

    fwd = jax.jit(inverted_residual_forward, static_argnames="stride")

    # --- stride = 1 (identity-size block; requires inp == 2 * branch_features)
    inp, oup, stride = 16, 16, 1
    x = jax.random.normal(kx1, (2, inp, 16, 16), jnp.float32)    # NCHW
    params = init_params(kp1, inp, oup, stride)
    out = jax.block_until_ready(fwd(x, params, stride=stride))
    ref = ref_forward(x, params, stride)
    assert out.shape == ref.shape == (2, oup, 16, 16)
    rel = float(jnp.linalg.norm(out - ref) / jnp.linalg.norm(ref))
    assert rel < 2e-2, rel                                   # structural check
    # bf16 MXU operands vs Precision.HIGHEST f32 reference -> loose elementwise tol
    assert jnp.allclose(out, ref, atol=1e-1, rtol=1e-1), float(
        jnp.max(jnp.abs(out - ref)))

    # --- stride = 2 (downsampling block, exercises branch1 + subsample path)
    inp2, oup2, stride2 = 16, 32, 2
    x2 = jax.random.normal(kx2, (2, inp2, 16, 16), jnp.float32)  # NCHW
    params2 = init_params(kp2, inp2, oup2, stride2)
    out2 = jax.block_until_ready(fwd(x2, params2, stride=stride2))
    ref2 = ref_forward(x2, params2, stride2)
    assert out2.shape == ref2.shape == (2, oup2, 8, 8)
    rel2 = float(jnp.linalg.norm(out2 - ref2) / jnp.linalg.norm(ref2))
    assert rel2 < 2e-2, rel2
    assert jnp.allclose(out2, ref2, atol=1e-1, rtol=1e-1), float(
        jnp.max(jnp.abs(out2 - ref2)))

    print("KERNEL_OK")
</pallas_src>

<mosaic_0001>
module attributes {stable_mosaic.version = 11 : i64} {
  func.func @_kernel_s1(%arg0: i32, %arg1: memref<1x16x256xf32, #tpu.memory_space<vmem>>, %arg2: memref<4x256xf32, #tpu.memory_space<vmem>>, %arg3: memref<8x8xbf16, #tpu.memory_space<vmem>>, %arg4: memref<8x1xf32, #tpu.memory_space<vmem>>, %arg5: memref<8x9xf32, #tpu.memory_space<vmem>>, %arg6: memref<8x1xf32, #tpu.memory_space<vmem>>, %arg7: memref<8x8xbf16, #tpu.memory_space<vmem>>, %arg8: memref<8x1xf32, #tpu.memory_space<vmem>>, %arg9: memref<1x8x512xf32, #tpu.memory_space<vmem>>) attributes {dimension_semantics = [#tpu.dimension_semantics<parallel>], iteration_bounds = array<i64: 2>, scalar_prefetch = 0 : i64, scratch_operands = 0 : i64, tpu.core_type = #tpu.core_type<tc>, window_params = [{transform_indices = @transform_0, window_bounds = array<i64: 1, 16, 256>}, {pipeline_mode = #tpu.pipeline_mode<synchronous>, transform_indices = @transform_1, window_bounds = array<i64: 4, 256>}, {pipeline_mode = #tpu.pipeline_mode<synchronous>, transform_indices = @transform_2, window_bounds = array<i64: 8, 8>}, {pipeline_mode = #tpu.pipeline_mode<synchronous>, transform_indices = @transform_3, window_bounds = array<i64: 8, 1>}, {pipeline_mode = #tpu.pipeline_mode<synchronous>, transform_indices = @transform_4, window_bounds = array<i64: 8, 9>}, {pipeline_mode = #tpu.pipeline_mode<synchronous>, transform_indices = @transform_5, window_bounds = array<i64: 8, 1>}, {pipeline_mode = #tpu.pipeline_mode<synchronous>, transform_indices = @transform_6, window_bounds = array<i64: 8, 8>}, {pipeline_mode = #tpu.pipeline_mode<synchronous>, transform_indices = @transform_7, window_bounds = array<i64: 8, 1>}, {transform_indices = @transform_8, window_bounds = array<i64: 1, 8, 512>}]} {
    %c0 = arith.constant 0 : index
    %c0_0 = arith.constant 0 : index
    %0 = vector.load %arg2[%c0, %c0_0] : memref<4x256xf32, #tpu.memory_space<vmem>>, vector<4x256xf32>
    %c0_1 = arith.constant 0 : index
    %c0_2 = arith.constant 0 : index
    %c0_3 = arith.constant 0 : index
    %1 = vector.load %arg1[%c0_1, %c0_2, %c0_3] : memref<1x16x256xf32, #tpu.memory_space<vmem>>, vector<1x8x256xf32>
    %2 = vector.shape_cast %1 : vector<1x8x256xf32> to vector<8x256xf32>
    %c0_4 = arith.constant 0 : index
    %c8 = arith.constant 8 : index
    %c0_5 = arith.constant 0 : index
    %3 = vector.load %arg1[%c0_4, %c8, %c0_5] : memref<1x16x256xf32, #tpu.memory_space<vmem>>, vector<1x8x256xf32>
    %4 = vector.shape_cast %3 : vector<1x8x256xf32> to vector<8x256xf32>
    %c0_6 = arith.constant 0 : index
    %c0_7 = arith.constant 0 : index
    %5 = vector.load %arg3[%c0_6, %c0_7] : memref<8x8xbf16, #tpu.memory_space<vmem>>, vector<8x8xbf16>
    %6 = arith.truncf %4 : vector<8x256xf32> to vector<8x256xbf16>
    %cst = arith.constant dense<0.000000e+00> : vector<8x256xf32>
    %7 = tpu.matmul %5, %6, %cst {dimension_numbers = #tpu.dot_dimension_numbers<[1], [0], [0], [1], [0, 0, 1, 1], [], []>} : vector<8x8xbf16>, vector<8x256xbf16>, vector<8x256xf32> -> vector<8x256xf32>
    %c0_8 = arith.constant 0 : index
    %c0_9 = arith.constant 0 : index
    %8 = vector.load %arg4[%c0_8, %c0_9] : memref<8x1xf32, #tpu.memory_space<vmem>>, vector<8x1xf32>
    %9 = vector.broadcast %8 : vector<8x1xf32> to vector<8x256xf32>
    %10 = arith.addf %7, %9 : vector<8x256xf32>
    %cst_10 = arith.constant 0.000000e+00 : f32
    %11 = vector.broadcast %cst_10 : f32 to vector<8x256xf32>
    %12 = arith.maximumf %10, %11 : vector<8x256xf32>
    %c0_11 = arith.constant 0 : index
    %c0_12 = arith.constant 0 : index
    %13 = vector.load %arg5[%c0_11, %c0_12] : memref<8x9xf32, #tpu.memory_space<vmem>>, vector<8x9xf32>
    %14 = vector.extract_strided_slice %0 {offsets = [0, 0], sizes = [1, 256], strides = [1, 1]} : vector<4x256xf32> to vector<1x256xf32>
    %15 = vector.extract_strided_slice %0 {offsets = [1, 0], sizes = [1, 256], strides = [1, 1]} : vector<4x256xf32> to vector<1x256xf32>
    %16 = vector.extract_strided_slice %0 {offsets = [2, 0], sizes = [1, 256], strides = [1, 1]} : vector<4x256xf32> to vector<1x256xf32>
    %17 = vector.extract_strided_slice %0 {offsets = [3, 0], sizes = [1, 256], strides = [1, 1]} : vector<4x256xf32> to vector<1x256xf32>
    %c1_i32 = arith.constant 1 : i32
    %18 = tpu.dynamic_rotate %12 by %c1_i32 dim 1 : vector<8x256xf32>, i32 -> vector<8x256xf32>
    %19 = vector.broadcast %14 : vector<1x256xf32> to vector<8x256xf32>
    %20 = arith.mulf %18, %19 : vector<8x256xf32>
    %c255_i32 = arith.constant 255 : i32
    %21 = tpu.dynamic_rotate %12 by %c255_i32 dim 1 : vector<8x256xf32>, i32 -> vector<8x256xf32>
    %22 = vector.broadcast %15 : vector<1x256xf32> to vector<8x256xf32>
    %23 = arith.mulf %21, %22 : vector<8x256xf32>
    %24 = vector.extract_strided_slice %13 {offsets = [0, 0], sizes = [8, 1], strides = [1, 1]} : vector<8x9xf32> to vector<8x1xf32>
    %25 = vector.broadcast %24 : vector<8x1xf32> to vector<8x256xf32>
    %26 = arith.mulf %25, %20 : vector<8x256xf32>
    %27 = vector.extract_strided_slice %13 {offsets = [0, 1], sizes = [8, 1], strides = [1, 1]} : vector<8x9xf32> to vector<8x1xf32>
    %28 = vector.broadcast %27 : vector<8x1xf32> to vector<8x256xf32>
    %29 = arith.mulf %28, %12 : vector<8x256xf32>
    %30 = arith.addf %26, %29 : vector<8x256xf32>
    %31 = vector.extract_strided_slice %13 {offsets = [0, 2], sizes = [8, 1], strides = [1, 1]} : vector<8x9xf32> to vector<8x1xf32>
    %32 = vector.broadcast %31 : vector<8x1xf32> to vector<8x256xf32>
    %33 = arith.mulf %32, %23 : vector<8x256xf32>
    %34 = arith.addf %30, %33 : vector<8x256xf32>
    %35 = vector.extract_strided_slice %13 {offsets = [0, 3], sizes = [8, 1], strides = [1, 1]} : vector<8x9xf32> to vector<8x1xf32>
    %36 = vector.broadcast %35 : vector<8x1xf32> to vector<8x256xf32>
    %37 = arith.mulf %36, %20 : vector<8x256xf32>
    %38 = vector.extract_strided_slice %13 {offsets = [0, 4], sizes = [8, 1], strides = [1, 1]} : vector<8x9xf32> to vector<8x1xf32>
    %39 = vector.broadcast %38 : vector<8x1xf32> to vector<8x256xf32>
    %40 = arith.mulf %39, %12 : vector<8x256xf32>
    %41 = arith.addf %37, %40 : vector<8x256xf32>
    %42 = vector.extract_strided_slice %13 {offsets = [0, 5], sizes = [8, 1], strides = [1, 1]} : vector<8x9xf32> to vector<8x1xf32>
    %43 = vector.broadcast %42 : vector<8x1xf32> to vector<8x256xf32>
    %44 = arith.mulf %43, %23 : vector<8x256xf32>
    %45 = arith.addf %41, %44 : vector<8x256xf32>
    %46 = vector.extract_strided_slice %13 {offsets = [0, 6], sizes = [8, 1], strides = [1, 1]} : vector<8x9xf32> to vector<8x1xf32>
    %47 = vector.broadcast %46 : vector<8x1xf32> to vector<8x256xf32>
    %48 = arith.mulf %47, %20 : vector<8x256xf32>
    %49 = vector.extract_strided_slice %13 {offsets = [0, 7], sizes = [8, 1], strides = [1, 1]} : vector<8x9xf32> to vector<8x1xf32>
    %50 = vector.broadcast %49 : vector<8x1xf32> to vector<8x256xf32>
    %51 = arith.mulf %50, %12 : vector<8x256xf32>
    %52 = arith.addf %48, %51 : vector<8x256xf32>
    %53 = vector.extract_strided_slice %13 {offsets = [0, 8], sizes = [8, 1], strides = [1, 1]} : vector<8x9xf32> to vector<8x1xf32>
    %54 = vector.broadcast %53 : vector<8x1xf32> to vector<8x256xf32>
    %55 = arith.mulf %54, %23 : vector<8x256xf32>
    %56 = arith.addf %52, %55 : vector<8x256xf32>
    %c16_i32 = arith.constant 16 : i32
    %57 = tpu.dynamic_rotate %34 by %c16_i32 dim 1 : vector<8x256xf32>, i32 -> vector<8x256xf32>
    %58 = vector.broadcast %16 : vector<1x256xf32> to vector<8x256xf32>
    %59 = arith.mulf %57, %58 : vector<8x256xf32>
    %c240_i32 = arith.constant 240 : i32
    %60 = tpu.dynamic_rotate %56 by %c240_i32 dim 1 : vector<8x256xf32>, i32 -> vector<8x256xf32>
    %61 = vector.broadcast %17 : vector<1x256xf32> to vector<8x256xf32>
    %62 = arith.mulf %60, %61 : vector<8x256xf32>
    %63 = arith.addf %59, %45 : vector<8x256xf32>
    %64 = arith.addf %63, %62 : vector<8x256xf32>
    %c0_13 = arith.constant 0 : index
    %c0_14 = arith.constant 0 : index
    %65 = vector.load %arg6[%c0_13, %c0_14] : memref<8x1xf32, #tpu.memory_space<vmem>>, vector<8x1xf32>
    %66 = vector.broadcast %65 : vector<8x1xf32> to vector<8x256xf32>
    %67 = arith.addf %64, %66 : vector<8x256xf32>
    %c0_15 = arith.constant 0 : index
    %c0_16 = arith.constant 0 : index
    %68 = vector.load %arg7[%c0_15, %c0_16] : memref<8x8xbf16, #tpu.memory_space<vmem>>, vector<8x8xbf16>
    %69 = arith.truncf %67 : vector<8x256xf32> to vector<8x256xbf16>
    %cst_17 = arith.constant dense<0.000000e+00> : vector<8x256xf32>
    %70 = tpu.matmul %68, %69, %cst_17 {dimension_numbers = #tpu.dot_dimension_numbers<[1], [0], [0], [1], [0, 0, 1, 1], [], []>} : vector<8x8xbf16>, vector<8x256xbf16>, vector<8x256xf32> -> vector<8x256xf32>
    %c0_18 = arith.constant 0 : index
    %c0_19 = arith.constant 0 : index
    %71 = vector.load %arg8[%c0_18, %c0_19] : memref<8x1xf32, #tpu.memory_space<vmem>>, vector<8x1xf32>
    %72 = vector.broadcast %71 : vector<8x1xf32> to vector<8x256xf32>
    %73 = arith.addf %70, %72 : vector<8x256xf32>
    %cst_20 = arith.constant 0.000000e+00 : f32
    %74 = vector.broadcast %cst_20 : f32 to vector<8x256xf32>
    %75 = arith.maximumf %73, %74 : vector<8x256xf32>
    %c0_21 = arith.constant 0 : index
    %c0_22 = arith.constant 0 : index
    %c0_23 = arith.constant 0 : index
    %76 = vector.load %arg9[%c0_21, %c0_22, %c0_23] : memref<1x8x512xf32, #tpu.memory_space<vmem>>, vector<1x8x256xf32>
    %77 = vector.shape_cast %76 : vector<1x8x256xf32> to vector<8x256xf32>
    %78 = vector.shape_cast %2 : vector<8x256xf32> to vector<1x8x256xf32>
    tpu.vector_store %arg9[%c0_21, %c0_22, %c0_23], %78 {strides = array<i32>} : memref<1x8x512xf32, #tpu.memory_space<vmem>>, vector<1x8x256xf32>,
    %c0_24 = arith.constant 0 : index
    %c0_25 = arith.constant 0 : index
    %c256 = arith.constant 256 : index
    %79 = vector.load %arg9[%c0_24, %c0_25, %c256] : memref<1x8x512xf32, #tpu.memory_space<vmem>>, vector<1x8x256xf32>
    %80 = vector.shape_cast %79 : vector<1x8x256xf32> to vector<8x256xf32>
    %81 = vector.shape_cast %75 : vector<8x256xf32> to vector<1x8x256xf32>
    tpu.vector_store %arg9[%c0_24, %c0_25, %c256], %81 {strides = array<i32>} : memref<1x8x512xf32, #tpu.memory_space<vmem>>, vector<1x8x256xf32>,
    return
  }
  func.func @transform_0(%arg0: i32) -> (i32, i32, i32) {
    %c0_i32 = arith.constant 0 : i32
    %c0_i32_0 = arith.constant 0 : i32
    %c0_i32_1 = arith.constant 0 : i32
    return %arg0, %c0_i32, %c0_i32_0 : i32, i32, i32
  }
  func.func @transform_1(%arg0: i32) -> (i32, i32) {
    %c0_i32 = arith.constant 0 : i32
    %c0_i32_0 = arith.constant 0 : i32
    %c0_i32_1 = arith.constant 0 : i32
    return %c0_i32, %c0_i32_0 : i32, i32
  }
  func.func @transform_2(%arg0: i32) -> (i32, i32) {
    %c0_i32 = arith.constant 0 : i32
    %c0_i32_0 = arith.constant 0 : i32
    %c0_i32_1 = arith.constant 0 : i32
    return %c0_i32, %c0_i32_0 : i32, i32
  }
  func.func @transform_3(%arg0: i32) -> (i32, i32) {
    %c0_i32 = arith.constant 0 : i32
    %c0_i32_0 = arith.constant 0 : i32
    %c0_i32_1 = arith.constant 0 : i32
    return %c0_i32, %c0_i32_0 : i32, i32
  }
  func.func @transform_4(%arg0: i32) -> (i32, i32) {
    %c0_i32 = arith.constant 0 : i32
    %c0_i32_0 = arith.constant 0 : i32
    %c0_i32_1 = arith.constant 0 : i32
    return %c0_i32, %c0_i32_0 : i32, i32
  }
  func.func @transform_5(%arg0: i32) -> (i32, i32) {
    %c0_i32 = arith.constant 0 : i32
    %c0_i32_0 = arith.constant 0 : i32
    %c0_i32_1 = arith.constant 0 : i32
    return %c0_i32, %c0_i32_0 : i32, i32
  }
  func.func @transform_6(%arg0: i32) -> (i32, i32) {
    %c0_i32 = arith.constant 0 : i32
    %c0_i32_0 = arith.constant 0 : i32
    %c0_i32_1 = arith.constant 0 : i32
    return %c0_i32, %c0_i32_0 : i32, i32
  }
  func.func @transform_7(%arg0: i32) -> (i32, i32) {
    %c0_i32 = arith.constant 0 : i32
    %c0_i32_0 = arith.constant 0 : i32
    %c0_i32_1 = arith.constant 0 : i32
    return %c0_i32, %c0_i32_0 : i32, i32
  }
  func.func @transform_8(%arg0: i32) -> (i32, i32, i32) {
    %c0_i32 = arith.constant 0 : i32
    %c0_i32_0 = arith.constant 0 : i32
    %c0_i32_1 = arith.constant 0 : i32
    return %arg0, %c0_i32, %c0_i32_0 : i32, i32, i32
  }
}

</mosaic_0001>

<llo_original>
// kernel: inverted_residual_forward.1
$region0: #{inverted_residual_forward.1}
  #allocation0 [shape = 'u32[]', space=smem, size = 0x4, offset = 0x4, fixed_abs, tag = 'smem constant byte address 0x4 - core index']
  #allocation1 [shape = 'u32[144,128]{1,0:T(1,128)}', space=vmem, size = 0x12000, scoped, tag = 'internal scratch']
  %s0 = inlined_call_operand.vmem [shape: f32[2,16,256], index: 0, kind: input, shape index: {}]
  %s1 = inlined_call_operand.vmem [shape: f32[4,256], index: 1, kind: input, shape index: {}]
  %s2 = inlined_call_operand.vmem [shape: bf16[8,8], index: 2, kind: input, shape index: {}]
  %s3 = inlined_call_operand.vmem [shape: f32[8,1], index: 3, kind: input, shape index: {}]
  %s4 = inlined_call_operand.vmem [shape: f32[8,9], index: 4, kind: input, shape index: {}]
  %s5 = inlined_call_operand.vmem [shape: f32[8,1], index: 5, kind: input, shape index: {}]
  %s6 = inlined_call_operand.vmem [shape: bf16[8,8], index: 6, kind: input, shape index: {}]
  %s7 = inlined_call_operand.vmem [shape: f32[8,1], index: 7, kind: input, shape index: {}]
  %s8 = inlined_call_operand.vmem [shape: f32[2,8,512], index: 8, kind: output, shape index: {}]
  %s9 = sld [smem:[#allocation0]]
  $region65: #{inverted_residual_forward.1} parent=0
    _
  %s11 = ssub.s32 1, %s9
  %s12 = scalar_select 0, %s11, %s9
  loop: start=0, step=1, limit=4
  $region2: #{inverted_residual_forward.1} parent=0 // loop_pre_header
    _
  $region3: #{inverted_residual_forward.1} parent=0 // loop_header
    %s14 = sphi 0, %s18
    %p15 = scmp.ge.s32.totalorder %s14, 4
    %s24 = sphi 0, %s26
    %s27 = sphi 0, %s24
    %s28 = sphi 0, %s27
    %s44 = sphi 0, %s28
    %s48 = sphi 0, %s48
    %s50 = sphi 0, %s48
    %s51 = sphi 0, %s50
    %s65 = sphi 0, %s51
    %s69 = sphi 0, %s69
    %s71 = sphi 0, %s69
    %s72 = sphi 0, %s71
    %s86 = sphi 0, %s72
    %s90 = sphi 0, %s90
    %s92 = sphi 0, %s90
    %s93 = sphi 0, %s92
    %s107 = sphi 0, %s93
    %s111 = sphi 0, %s111
    %s113 = sphi 0, %s111
    %s114 = sphi 0, %s113
    %s128 = sphi 0, %s114
    %s132 = sphi 0, %s132
    %s134 = sphi 0, %s132
    %s135 = sphi 0, %s134
    %s149 = sphi 0, %s135
    %s153 = sphi 0, %s153
    %s155 = sphi 0, %s153
    %s156 = sphi 0, %s155
    %s170 = sphi 0, %s156
    %s174 = sphi 0, %s174
    %s176 = sphi 0, %s174
    %s177 = sphi 0, %s176
    %s191 = sphi 0, %s177
    %s197 = sphi 0, %s199
    %s200 = sphi 0, %s197
    %s201 = sphi 0, %s200
    %s217 = sphi 0, %s201
  $region4: #{inverted_residual_forward.1} parent=0 // loop_header_branch
    %17 = sbr.rel (%p15) target = $region8
  $region5: #{inverted_residual_forward.1} parent=0 // loop_body
    %s19 = ssub.s32 %s14, 1
    %s20 = ssub.s32 %s14, 2
    %s21 = sadd.s32 %s14, 1
    %s22 = ssub.s32 %s14, %s21
    %p23 = scmp.eq.s32.totalorder %s22, 0
    %s25 = sadd.s32 %s24, 1
    %s26 = scalar_select %p23, %s24, %s25
    %p29 = pneg %p23
    %p30 = scmp.eq.s32.totalorder %s14, 1
    %p31 = por %p29, %p30
    %p32 = scmp.ne.s32.totalorder %s24, %s27
    %p33 = scmp.eq.s32.totalorder %s14, 0
    %p34 = por %p32, %p33
    %p35 = scmp.ne.s32.totalorder %s24, %s27
    %p36 = scmp.eq.s32.totalorder %s19, 1
    %p37 = por %p35, %p36
    %p38 = scmp.ne.s32.totalorder %s27, %s28
    %p39 = scmp.eq.s32.totalorder %s19, 0
    %p40 = por %p38, %p39
    %p41 = scmp.ne.s32.totalorder %s27, %s28
    %p42 = scmp.eq.s32.totalorder %s20, 1
    %p43 = por %p41, %p42
    %p45 = scmp.ne.s32.totalorder %s28, %s44
    %p46 = scmp.eq.s32.totalorder %s20, 0
    %p47 = por %p45, %p46
    %s49 = sadd.s32 %s48, 1
    %p52 = scmp.eq.s32.totalorder %s14, 1
    %p53 = scmp.ne.s32.totalorder %s48, %s50
    %p54 = scmp.eq.s32.totalorder %s14, 0
    %p55 = por %p53, %p54
    %p56 = scmp.ne.s32.totalorder %s48, %s50
    %p57 = scmp.eq.s32.totalorder %s19, 1
    %p58 = por %p56, %p57
    %p59 = scmp.ne.s32.totalorder %s50, %s51
    %p60 = scmp.eq.s32.totalorder %s19, 0
    %p61 = por %p59, %p60
    %p62 = scmp.ne.s32.totalorder %s50, %s51
    %p63 = scmp.eq.s32.totalorder %s20, 1
    %p64 = por %p62, %p63
    %p66 = scmp.ne.s32.totalorder %s51, %s65
    %p67 = scmp.eq.s32.totalorder %s20, 0
    %p68 = por %p66, %p67
    %s70 = sadd.s32 %s69, 1
    %p73 = scmp.eq.s32.totalorder %s14, 1
    %p74 = scmp.ne.s32.totalorder %s69, %s71
    %p75 = scmp.eq.s32.totalorder %s14, 0
    %p76 = por %p74, %p75
    %p77 = scmp.ne.s32.totalorder %s69, %s71
    %p78 = scmp.eq.s32.totalorder %s19, 1
    %p79 = por %p77, %p78
    %p80 = scmp.ne.s32.totalorder %s71, %s72
    %p81 = scmp.eq.s32.totalorder %s19, 0
    %p82 = por %p80, %p81
    %p83 = scmp.ne.s32.totalorder %s71, %s72
    %p84 = scmp.eq.s32.totalorder %s20, 1
    %p85 = por %p83, %p84
    %p87 = scmp.ne.s32.totalorder %s72, %s86
    %p88 = scmp.eq.s32.totalorder %s20, 0
    %p89 = por %p87, %p88
    %s91 = sadd.s32 %s90, 1
    %p94 = scmp.eq.s32.totalorder %s14, 1
    %p95 = scmp.ne.s32.totalorder %s90, %s92
    %p96 = scmp.eq.s32.totalorder %s14, 0
    %p97 = por %p95, %p96
    %p98 = scmp.ne.s32.totalorder %s90, %s92
    %p99 = scmp.eq.s32.totalorder %s19, 1
    %p100 = por %p98, %p99
    %p101 = scmp.ne.s32.totalorder %s92, %s93
    %p102 = scmp.eq.s32.totalorder %s19, 0
    %p103 = por %p101, %p102
    %p104 = scmp.ne.s32.totalorder %s92, %s93
    %p105 = scmp.eq.s32.totalorder %s20, 1
    %p106 = por %p104, %p105
    %p108 = scmp.ne.s32.totalorder %s93, %s107
    %p109 = scmp.eq.s32.totalorder %s20, 0
    %p110 = por %p108, %p109
    %s112 = sadd.s32 %s111, 1
    %p115 = scmp.eq.s32.totalorder %s14, 1
    %p116 = scmp.ne.s32.totalorder %s111, %s113
    %p117 = scmp.eq.s32.totalorder %s14, 0
    %p118 = por %p116, %p117
    %p119 = scmp.ne.s32.totalorder %s111, %s113
    %p120 = scmp.eq.s32.totalorder %s19, 1
    %p121 = por %p119, %p120
    %p122 = scmp.ne.s32.totalorder %s113, %s114
    %p123 = scmp.eq.s32.totalorder %s19, 0
    %p124 = por %p122, %p123
    %p125 = scmp.ne.s32.totalorder %s113, %s114
    %p126 = scmp.eq.s32.totalorder %s20, 1
    %p127 = por %p125, %p126
    %p129 = scmp.ne.s32.totalorder %s114, %s128
    %p130 = scmp.eq.s32.totalorder %s20, 0
    %p131 = por %p129, %p130
    %s133 = sadd.s32 %s132, 1
    %p136 = scmp.eq.s32.totalorder %s14, 1
    %p137 = scmp.ne.s32.totalorder %s132, %s134
    %p138 = scmp.eq.s32.totalorder %s14, 0
    %p139 = por %p137, %p138
    %p140 = scmp.ne.s32.totalorder %s132, %s134
    %p141 = scmp.eq.s32.totalorder %s19, 1
    %p142 = por %p140, %p141
    %p143 = scmp.ne.s32.totalorder %s134, %s135
    %p144 = scmp.eq.s32.totalorder %s19, 0
    %p145 = por %p143, %p144
    %p146 = scmp.ne.s32.totalorder %s134, %s135
    %p147 = scmp.eq.s32.totalorder %s20, 1
    %p148 = por %p146, %p147
    %p150 = scmp.ne.s32.totalorder %s135, %s149
    %p151 = scmp.eq.s32.totalorder %s20, 0
    %p152 = por %p150, %p151
    %s154 = sadd.s32 %s153, 1
    %p157 = scmp.eq.s32.totalorder %s14, 1
    %p158 = scmp.ne.s32.totalorder %s153, %s155
    %p159 = scmp.eq.s32.totalorder %s14, 0
    %p160 = por %p158, %p159
    %p161 = scmp.ne.s32.totalorder %s153, %s155
    %p162 = scmp.eq.s32.totalorder %s19, 1
    %p163 = por %p161, %p162
    %p164 = scmp.ne.s32.totalorder %s155, %s156
    %p165 = scmp.eq.s32.totalorder %s19, 0
    %p166 = por %p164, %p165
    %p167 = scmp.ne.s32.totalorder %s155, %s156
    %p168 = scmp.eq.s32.totalorder %s20, 1
    %p169 = por %p167, %p168
    %p171 = scmp.ne.s32.totalorder %s156, %s170
    %p172 = scmp.eq.s32.totalorder %s20, 0
    %p173 = por %p171, %p172
    %s175 = sadd.s32 %s174, 1
    %p178 = scmp.eq.s32.totalorder %s14, 1
    %p179 = scmp.ne.s32.totalorder %s174, %s176
    %p180 = scmp.eq.s32.totalorder %s14, 0
    %p181 = por %p179, %p180
    %p182 = scmp.ne.s32.totalorder %s174, %s176
    %p183 = scmp.eq.s32.totalorder %s19, 1
    %p184 = por %p182, %p183
    %p185 = scmp.ne.s32.totalorder %s176, %s177
    %p186 = scmp.eq.s32.totalorder %s19, 0
    %p187 = por %p185, %p186
    %p188 = scmp.ne.s32.totalorder %s176, %s177
    %p189 = scmp.eq.s32.totalorder %s20, 1
    %p190 = por %p188, %p189
    %p192 = scmp.ne.s32.totalorder %s177, %s191
    %p193 = scmp.eq.s32.totalorder %s20, 0
    %p194 = por %p192, %p193
    %s195 = ssub.s32 %s14, %s21
    %p196 = scmp.eq.s32.totalorder %s195, 0
    %s198 = sadd.s32 %s197, 1
    %s199 = scalar_select %p196, %s197, %s198
    %p202 = pneg %p196
    %p203 = scmp.eq.s32.totalorder %s14, 1
    %p204 = por %p202, %p203
    %p205 = scmp.ne.s32.totalorder %s197, %s200
    %p206 = scmp.eq.s32.totalorder %s14, 0
    %p207 = por %p205, %p206
    %p208 = scmp.ne.s32.totalorder %s197, %s200
    %p209 = scmp.eq.s32.totalorder %s19, 1
    %p210 = por %p208, %p209
    %p211 = scmp.ne.s32.totalorder %s200, %s201
    %p212 = scmp.eq.s32.totalorder %s19, 0
    %p213 = por %p211, %p212
    %p214 = scmp.ne.s32.totalorder %s200, %s201
    %p215 = scmp.eq.s32.totalorder %s20, 1
    %p216 = por %p214, %p215
    %p218 = scmp.ne.s32.totalorder %s201, %s217
    %p219 = scmp.eq.s32.totalorder %s20, 0
    %p220 = por %p218, %p219
    %p221 = scmp.le.s32.totalorder 1, %s14
    %p222 = scmp.lt.s32.totalorder %s14, 3
    %p223 = pnand %p221, %p222
    %p224 = pneg %p223
    // Predicated region
    $region9: #{inverted_residual_forward.1} parent=5 // pred_check
      _
    $region10: #{inverted_residual_forward.1} parent=5 // pred_check_branch
      %226 = sbr.rel (%p223) target = $region12
    $region11: #{inverted_residual_forward.1} parent=5 // pred_region
      %s227 = ssub.s32 %s14, 1
      // Predicated region
      $region13: #{inverted_residual_forward.1} parent=11 // pred_check
        %p228 = pneg %p61
      $region14: #{inverted_residual_forward.1} parent=11 // pred_check_branch
        %230 = sbr.rel (%p228) target = $region16
      $region15: #{inverted_residual_forward.1} parent=11 // pred_region
        _
      $region16: #{inverted_residual_forward.1} parent=11 // pred_fallthru
        _
      // Predicated region
      $region17: #{inverted_residual_forward.1} parent=11 // pred_check
        %p231 = pneg %p82
      $region18: #{inverted_residual_forward.1} parent=11 // pred_check_branch
        %233 = sbr.rel (%p231) target = $region20
      $region19: #{inverted_residual_forward.1} parent=11 // pred_region
        _
      $region20: #{inverted_residual_forward.1} parent=11 // pred_fallthru
        _
      // Predicated region
      $region21: #{inverted_residual_forward.1} parent=11 // pred_check
        %p234 = pneg %p103
      $region22: #{inverted_residual_forward.1} parent=11 // pred_check_branch
        %236 = sbr.rel (%p234) target = $region24
      $region23: #{inverted_residual_forward.1} parent=11 // pred_region
        _
      $region24: #{inverted_residual_forward.1} parent=11 // pred_fallthru
        _
      // Predicated region
      $region25: #{inverted_residual_forward.1} parent=11 // pred_check
        %p237 = pneg %p124
      $region26: #{inverted_residual_forward.1} parent=11 // pred_check_branch
        %239 = sbr.rel (%p237) target = $region28
      $region27: #{inverted_residual_forward.1} parent=11 // pred_region
        _
      $region28: #{inverted_residual_forward.1} parent=11 // pred_fallthru
        _
      // Predicated region
      $region29: #{inverted_residual_forward.1} parent=11 // pred_check
        %p240 = pneg %p145
      $region30: #{inverted_residual_forward.1} parent=11 // pred_check_branch
        %242 = sbr.rel (%p240) target = $region32
      $region31: #{inverted_residual_forward.1} parent=11 // pred_region
        _
      $region32: #{inverted_residual_forward.1} parent=11 // pred_fallthru
        _
      // Predicated region
      $region33: #{inverted_residual_forward.1} parent=11 // pred_check
        %p243 = pneg %p166
      $region34: #{inverted_residual_forward.1} parent=11 // pred_check_branch
        %245 = sbr.rel (%p243) target = $region36
      $region35: #{inverted_residual_forward.1} parent=11 // pred_region
        _
      $region36: #{inverted_residual_forward.1} parent=11 // pred_fallthru
        _
      // Predicated region
      $region37: #{inverted_residual_forward.1} parent=11 // pred_check
        %p246 = pneg %p187
      $region38: #{inverted_residual_forward.1} parent=11 // pred_check_branch
        %248 = sbr.rel (%p246) target = $region40
      $region39: #{inverted_residual_forward.1} parent=11 // pred_region
        _
      $region40: #{inverted_residual_forward.1} parent=11 // pred_fallthru
        _
    $region12: #{inverted_residual_forward.1} parent=5 // pred_fallthru
      _
    %p249 = scmp.lt.s32.totalorder %s14, 2
    // Predicated region
    $region41: #{inverted_residual_forward.1} parent=5 // pred_check
      %p250 = pneg %p249
    $region42: #{inverted_residual_forward.1} parent=5 // pred_check_branch
      %252 = sbr.rel (%p250) target = $region44
    $region43: #{inverted_residual_forward.1} parent=5 // pred_region
      // Predicated region
      $region45: #{inverted_residual_forward.1} parent=43 // pred_check
        %p253 = pneg %p34
      $region46: #{inverted_residual_forward.1} parent=43 // pred_check_branch
        %255 = sbr.rel (%p253) target = $region48
      $region47: #{inverted_residual_forward.1} parent=43 // pred_region
        %p256 = scmp.lt.s32.totalorder %s14, 1
        %s257 = scalar_select %p256, %s14, 1
        %s258 = smul.addr %s257, 4
        %s259 = smul.addr %s258, 8
        %s260 = scalar_lea.vmem %s0, %s259
      $region48: #{inverted_residual_forward.1} parent=43 // pred_fallthru
        _
    $region44: #{inverted_residual_forward.1} parent=5 // pred_fallthru
      _
    %p261 = scmp.le.s32.totalorder 1, %s14
    %p262 = scmp.lt.s32.totalorder %s14, 3
    %p263 = pnand %p261, %p262
    %p264 = pneg %p263
    // Predicated region
    $region49: #{inverted_residual_forward.1} parent=5 // pred_check
      _
    $region50: #{inverted_residual_forward.1} parent=5 // pred_check_branch
      %266 = sbr.rel (%p263) target = $region52
    $region51: #{inverted_residual_forward.1} parent=5 // pred_region
      %s267 = ssub.s32 %s14, 1
      %p268 = scmp.lt.s32.totalorder %s19, 1
      %s269 = scalar_select %p268, %s19, 1
      %s270 = smul.addr %s269, 4
      %s271 = smul.addr %s270, 8
      %s272 = scalar_lea.vmem %s0, %s271
      %p273 = pneg %p40
      %p274 = pneg %p37
      %p275 = pneg %p61
      %p276 = pneg %p58
      %p277 = pneg %p82
      %p278 = pneg %p79
      %p279 = pneg %p103
      %p280 = pneg %p100
      %p281 = pneg %p124
      %p282 = pneg %p121
      %p283 = pneg %p145
      %p284 = pneg %p142
      %p285 = pneg %p166
      %p286 = pneg %p163
      %p287 = pneg %p187
      %p288 = pneg %p184
      %p289 = pneg %p213
      %p290 = pneg %p210
      %p291 = scmp.lt.s32.totalorder %s19, 1
      %s292 = scalar_select %p291, %s19, 1
      %s293 = smul.addr %s292, 4
      %s294 = smul.addr %s293, 8
      %s295 = scalar_lea.vmem %s8, %s294
      %p296 = scmp.lt.s32.totalorder %s19, 1
      %s297 = scalar_select %p296, %s19, 1
      %s298 = smul.addr %s297, 4
      %s299 = smul.addr %s298, 8
      %s300 = scalar_lea.vmem %s0, %s299
      %p301 = scmp.lt.s32.totalorder %s19, 1
      %s302 = scalar_select %p301, %s19, 1
      %s303 = smul.addr %s302, 4
      %s304 = smul.addr %s303, 8
      %s305 = scalar_lea.vmem %s8, %s304
      %v307 = vld [vmem:[%s1] sm:$0xff]
      %v308 = vld [vmem:[%s300] sm:$0xff]
      %v309 = vld [vmem:[%s300 + $0x8] sm:$0xff]
      %v310 = vld [vmem:[%s300 + $0x10] sm:$0xff]
      %v311 = vld [vmem:[%s300 + $0x18] sm:$0xff]
      %v312 = vld [vmem:[%s2] sm:$0xf]
      %v313 = vpack.c.bf16 %v310, %v310
      %v314 = vpack.c.bf16 %v311, %v311
      %v315 = vld [vmem:[%s3] sm:$0xff]
      %317 = vset.pattern.permute.xlu0 0
      %318 = vperm.xlu0 %317, %v315
      %v319 = vpop.permute.xlu0 %318
      %vm321 = vcmask 64512
      %v323 = vsel %vm321, %v312, 0
      %vm325 = vcmask 1043456
      %v327 = vsel %vm325, %v313, 0
      %v330 = vsel %vm325, %v314, 0
      %332 = vmatprep.subr.bf16.mxu0 %v330
      %333 = vmatpush1.bf16.msra.mxu0 %v327
      %334 = vmatprep.subr.bf16.mxu0 0
      %335 = vmatpush1.bf16.msra.mxu0 0
      %336 = vmatprep.subr.bf16.mxu0 0
      %337 = vmatpush1.bf16.msra.mxu0 0
      %338 = vmatprep.subr.bf16.mxu0 0
      %339 = vmatpush1.bf16.msra.mxu0 0
      %340 = vmatprep.subr.bf16.mxu0 0
      %341 = vmatpush1.bf16.msra.mxu0 0
      %342 = vmatprep.subr.bf16.mxu0 0
      %343 = vmatpush1.bf16.msra.mxu0 0
      %344 = vmatprep.subr.bf16.mxu0 0
      %345 = vmatpush1.bf16.msra.mxu0 0
      %346 = vmatprep.subr.bf16.mxu0 0
      %347 = vmatpush1.bf16.msra.mxu0 0
      %348 = vmatprep.subr.bf16.mxu0 0
      %349 = vmatpush1.bf16.msra.mxu0 0
      %350 = vmatprep.subr.bf16.mxu0 0
      %351 = vmatpush1.bf16.msra.mxu0 0
      %352 = vmatprep.subr.bf16.mxu0 0
      %353 = vmatpush1.bf16.msra.mxu0 0
      %354 = vmatprep.subr.bf16.mxu0 0
      %355 = vmatpush1.bf16.msra.mxu0 0
      %356 = vmatprep.subr.bf16.mxu0 0
      %357 = vmatpush1.bf16.msra.mxu0 0
      %358 = vmatprep.subr.bf16.mxu0 0
      %359 = vmatpush1.bf16.msra.mxu0 0
      %360 = vmatprep.subr.bf16.mxu0 0
      %361 = vmatpush1.bf16.msra.mxu0 0
      %362 = vmatprep.subr.bf16.mxu0 0
      %363 = vmatpush1.bf16.msra.mxu0 0
      %364 = vmatprep.mubr.bf16.mxu0 0
      %365 = vmatmul.mubr.bf16.gmra.mrb[0].mxu0 %v323
      %v366 = vpop.f32.mrb[0].mxu0
      %v367 = vadd.f32 %v319, %v366
      %v368 = vpop.f32.mrb[0].mxu0
      %v369 = vadd.f32 %v319, %v368
      %v370 = vpop.f32.mrb[0].mxu0
      %v371 = vpop.f32.mrb[0].mxu0
      %372 = vdwg.mxu0
      %v373 = vmax.f32 %v367, 0.0
      %v374 = vmax.f32 %v369, 0.0
      %v375 = vld [vmem:[%s4] sm:$0xff]
      %376 = vrot.lane.b32.xlu0 %v373, 1
      %v377 = vpop.permute.xlu0 %376
      %378 = vrot.lane.b32.xlu0 %v374, 1
      %v379 = vpop.permute.xlu0 %378
      %v380 = vlaneseq
      %v381 = vand.u32 %v380, 127
      %vm382 = vcmp.lt.s32.totalorder %v381, 1
      %v383 = vsel %vm382, %v377, %v379
      %v384 = vsel %vm382, %v379, %v377
      %v386 = vlaneseq
      %v387 = vshrl.u32 %v386, 7
      %v388 = vsub.s32 0, %v387
      %v389 = vrot.slane %v307, %v388
      %v390 = vlaneseq
      %v391 = vshrl.u32 %v390, 7
      %v392 = vsub.s32 4, %v391
      %v393 = vrot.slane %v307, %v392
      %v396 = vlaneseq
      %v397 = vshrl.u32 %v396, 7
      %v398 = vsub.s32 0, %v397
      %v399 = vrot.slane %v389, %v398
      %v400 = vlaneseq
      %v401 = vshrl.u32 %v400, 7
      %v402 = vsub.s32 0, %v401
      %v403 = vrot.slane %v393, %v402
      %v404 = vmul.f32 %v384, %v399
      %v405 = vmul.f32 %v383, %v403
      %406 = vrot.lane.b32.xlu0 %v373, 127
      %v407 = vpop.permute.xlu0 %406
      %408 = vrot.lane.b32.xlu0 %v374, 127
      %v409 = vpop.permute.xlu0 %408
      %vm410 = vcmp.lt.s32.totalorder %v381, 127
      %v411 = vsel %vm410, %v407, %v409
      %v412 = vsel %vm410, %v409, %v407
      %v413 = vlaneseq
      %v414 = vshrl.u32 %v413, 7
      %v415 = vsub.s32 1, %v414
      %v416 = vrot.slane %v307, %v415
      %v417 = vlaneseq
      %v418 = vshrl.u32 %v417, 7
      %v419 = vsub.s32 5, %v418
      %v420 = vrot.slane %v307, %v419
      %v423 = vlaneseq
      %v424 = vshrl.u32 %v423, 7
      %v425 = vsub.s32 1, %v424
      %v426 = vrot.slane %v416, %v425
      %v427 = vlaneseq
      %v428 = vshrl.u32 %v427, 7
      %v429 = vsub.s32 1, %v428
      %v430 = vrot.slane %v420, %v429
      %v431 = vmul.f32 %v411, %v426
      %v432 = vmul.f32 %v412, %v430
      %434 = vset.pattern.permute.xlu0 0
      %435 = vperm.xlu0 %434, %v375
      %v436 = vpop.permute.xlu0 %435
      %v438 = vmul.f32 %v436, %v404
      %v439 = vmul.f32 %v436, %v405
      %440 = vset.pattern.permute.xlu0 1
      %441 = vperm.xlu0 %440, %v375
      %v442 = vpop.permute.xlu0 %441
      %v444 = vmul.f32 %v442, %v373
      %v445 = vmul.f32 %v442, %v374
      %v446 = vadd.f32 %v438, %v444
      %v447 = vadd.f32 %v439, %v445
      %448 = vset.pattern.permute.xlu0 2
      %449 = vperm.xlu0 %448, %v375
      %v450 = vpop.permute.xlu0 %449
      %v452 = vmul.f32 %v450, %v431
      %v453 = vmul.f32 %v450, %v432
      %v454 = vadd.f32 %v446, %v452
      %v455 = vadd.f32 %v447, %v453
      %456 = vset.pattern.permute.xlu0 3
      %457 = vperm.xlu0 %456, %v375
      %v458 = vpop.permute.xlu0 %457
      %v460 = vmul.f32 %v458, %v404
      %v461 = vmul.f32 %v458, %v405
      %462 = vset.pattern.permute.xlu0 4
      %463 = vperm.xlu0 %462, %v375
      %v464 = vpop.permute.xlu0 %463
      %v466 = vmul.f32 %v464, %v373
      %v467 = vmul.f32 %v464, %v374
      %v468 = vadd.f32 %v460, %v466
      %v469 = vadd.f32 %v461, %v467
      %470 = vset.pattern.permute.xlu0 5
      %471 = vperm.xlu0 %470, %v375
      %v472 = vpop.permute.xlu0 %471
      %v474 = vmul.f32 %v472, %v431
      %v475 = vmul.f32 %v472, %v432
      %v476 = vadd.f32 %v468, %v474
      %v477 = vadd.f32 %v469, %v475
      %478 = vset.pattern.permute.xlu0 6
      %479 = vperm.xlu0 %478, %v375
      %v480 = vpop.permute.xlu0 %479
      %v482 = vmul.f32 %v480, %v404
      %v483 = vmul.f32 %v480, %v405
      %484 = vset.pattern.permute.xlu0 7
      %485 = vperm.xlu0 %484, %v375
      %v486 = vpop.permute.xlu0 %485
      %v488 = vmul.f32 %v486, %v373
      %v489 = vmul.f32 %v486, %v374
      %v490 = vadd.f32 %v482, %v488
      %v491 = vadd.f32 %v483, %v489
      %492 = vset.pattern.permute.xlu0 8
      %493 = vperm.xlu0 %492, %v375
      %v494 = vpop.permute.xlu0 %493
      %v496 = vmul.f32 %v494, %v431
      %v497 = vmul.f32 %v494, %v432
      %v498 = vadd.f32 %v490, %v496
      %v499 = vadd.f32 %v491, %v497
      %500 = vrot.lane.b32.xlu0 %v454, 16
      %v501 = vpop.permute.xlu0 %500
      %502 = vrot.lane.b32.xlu0 %v455, 16
      %v503 = vpop.permute.xlu0 %502
      %vm504 = vcmp.lt.s32.totalorder %v381, 16
      %v505 = vsel %vm504, %v501, %v503
      %v506 = vsel %vm504, %v503, %v501
      %v507 = vlaneseq
      %v508 = vshrl.u32 %v507, 7
      %v509 = vsub.s32 2, %v508
      %v510 = vrot.slane %v307, %v509
      %v511 = vlaneseq
      %v512 = vshrl.u32 %v511, 7
      %v513 = vsub.s32 6, %v512
      %v514 = vrot.slane %v307, %v513
      %v517 = vlaneseq
      %v518 = vshrl.u32 %v517, 7
      %v519 = vsub.s32 2, %v518
      %v520 = vrot.slane %v510, %v519
      %v521 = vlaneseq
      %v522 = vshrl.u32 %v521, 7
      %v523 = vsub.s32 2, %v522
      %v524 = vrot.slane %v514, %v523
      %v525 = vmul.f32 %v506, %v520
      %v526 = vmul.f32 %v505, %v524
      %527 = vrot.lane.b32.xlu0 %v498, 112
      %v528 = vpop.permute.xlu0 %527
      %529 = vrot.lane.b32.xlu0 %v499, 112
      %v530 = vpop.permute.xlu0 %529
      %vm531 = vcmp.lt.s32.totalorder %v381, 112
      %v532 = vsel %vm531, %v528, %v530
      %v533 = vsel %vm531, %v530, %v528
      %v534 = vlaneseq
      %v535 = vshrl.u32 %v534, 7
      %v536 = vsub.s32 3, %v535
      %v537 = vrot.slane %v307, %v536
      %v538 = vlaneseq
      %v539 = vshrl.u32 %v538, 7
      %v540 = vsub.s32 7, %v539
      %v541 = vrot.slane %v307, %v540
      %v544 = vlaneseq
      %v545 = vshrl.u32 %v544, 7
      %v546 = vsub.s32 3, %v545
      %v547 = vrot.slane %v537, %v546
      %v548 = vlaneseq
      %v549 = vshrl.u32 %v548, 7
      %v550 = vsub.s32 3, %v549
      %v551 = vrot.slane %v541, %v550
      %v552 = vmul.f32 %v532, %v547
      %v553 = vmul.f32 %v533, %v551
      %v554 = vadd.f32 %v525, %v476
      %v555 = vadd.f32 %v526, %v477
      %v556 = vadd.f32 %v554, %v552
      %v557 = vadd.f32 %v555, %v553
      %v558 = vld [vmem:[%s5] sm:$0xff]
      %560 = vset.pattern.permute.xlu0 0
      %561 = vperm.xlu0 %560, %v558
      %v562 = vpop.permute.xlu0 %561
      %v564 = vadd.f32 %v556, %v562
      %v565 = vadd.f32 %v557, %v562
      %v566 = vld [vmem:[%s6] sm:$0xf]
      %v567 = vpack.c.bf16 %v564, %v564
      %v568 = vpack.c.bf16 %v565, %v565
      %v569 = vld [vmem:[%s7] sm:$0xff]
      %571 = vset.pattern.permute.xlu0 0
      %572 = vperm.xlu0 %571, %v569
      %v573 = vpop.permute.xlu0 %572
      %v576 = vsel %vm321, %v566, 0
      %v579 = vsel %vm325, %v567, 0
      %v582 = vsel %vm325, %v568, 0
      %584 = vmatprep.subr.bf16.mxu0 %v582
      %585 = vmatpush1.bf16.msra.mxu0 %v579
      %586 = vmatprep.subr.bf16.mxu0 0
      %587 = vmatpush1.bf16.msra.mxu0 0
      %588 = vmatprep.subr.bf16.mxu0 0
      %589 = vmatpush1.bf16.msra.mxu0 0
      %590 = vmatprep.subr.bf16.mxu0 0
      %591 = vmatpush1.bf16.msra.mxu0 0
      %592 = vmatprep.subr.bf16.mxu0 0
      %593 = vmatpush1.bf16.msra.mxu0 0
      %594 = vmatprep.subr.bf16.mxu0 0
      %595 = vmatpush1.bf16.msra.mxu0 0
      %596 = vmatprep.subr.bf16.mxu0 0
      %597 = vmatpush1.bf16.msra.mxu0 0
      %598 = vmatprep.subr.bf16.mxu0 0
      %599 = vmatpush1.bf16.msra.mxu0 0
      %600 = vmatprep.subr.bf16.mxu0 0
      %601 = vmatpush1.bf16.msra.mxu0 0
      %602 = vmatprep.subr.bf16.mxu0 0
      %603 = vmatpush1.bf16.msra.mxu0 0
      %604 = vmatprep.subr.bf16.mxu0 0
      %605 = vmatpush1.bf16.msra.mxu0 0
      %606 = vmatprep.subr.bf16.mxu0 0
      %607 = vmatpush1.bf16.msra.mxu0 0
      %608 = vmatprep.subr.bf16.mxu0 0
      %609 = vmatpush1.bf16.msra.mxu0 0
      %610 = vmatprep.subr.bf16.mxu0 0
      %611 = vmatpush1.bf16.msra.mxu0 0
      %612 = vmatprep.subr.bf16.mxu0 0
      %613 = vmatpush1.bf16.msra.mxu0 0
      %614 = vmatprep.subr.bf16.mxu0 0
      %615 = vmatpush1.bf16.msra.mxu0 0
      %616 = vmatprep.mubr.bf16.mxu0 0
      %617 = vmatmul.mubr.bf16.gmra.mrb[0].mxu0 %v576
      %v618 = vpop.f32.mrb[0].mxu0
      %v619 = vadd.f32 %v573, %v618
      %v620 = vpop.f32.mrb[0].mxu0
      %v621 = vadd.f32 %v573, %v620
      %v622 = vpop.f32.mrb[0].mxu0
      %v623 = vpop.f32.mrb[0].mxu0
      %624 = vdwg.mxu0
      %v625 = vmax.f32 %v619, 0.0
      %v626 = vmax.f32 %v621, 0.0
      %627 = vst [vmem:[%s305] sm:$0xff] %v308
      %628 = vst [vmem:[%s305 + $0x8] sm:$0xff] %v309
      %629 = vst [vmem:[%s305 + $0x10] sm:$0xff] %v625
      %630 = vst [vmem:[%s305 + $0x18] sm:$0xff] %v626
      %p631 = scmp.lt.s32.totalorder %s19, 1
      %s632 = scalar_select %p631, %s19, 1
      %s633 = smul.addr %s632, 4
      %s634 = smul.addr %s633, 8
      %s635 = scalar_lea.vmem %s8, %s634
      // Predicated region
      $region53: #{inverted_residual_forward.1} parent=51 // pred_check
        %p636 = pneg %p210
      $region54: #{inverted_residual_forward.1} parent=51 // pred_check_branch
        %638 = sbr.rel (%p636) target = $region56
      $region55: #{inverted_residual_forward.1} parent=51 // pred_region
        _
      $region56: #{inverted_residual_forward.1} parent=51 // pred_fallthru
        _
    $region52: #{inverted_residual_forward.1} parent=5 // pred_fallthru
      _
    %p639 = scmp.le.s32.totalorder 2, %s14
    // Predicated region
    $region57: #{inverted_residual_forward.1} parent=5 // pred_check
      %p640 = pneg %p639
    $region58: #{inverted_residual_forward.1} parent=5 // pred_check_branch
      %642 = sbr.rel (%p640) target = $region60
    $region59: #{inverted_residual_forward.1} parent=5 // pred_region
      %s643 = ssub.s32 %s14, 2
      // Predicated region
      $region61: #{inverted_residual_forward.1} parent=59 // pred_check
        %p644 = pneg %p216
      $region62: #{inverted_residual_forward.1} parent=59 // pred_check_branch
        %646 = sbr.rel (%p644) target = $region64
      $region63: #{inverted_residual_forward.1} parent=59 // pred_region
        %p647 = scmp.lt.s32.totalorder %s20, 1
        %s648 = scalar_select %p647, %s20, 1
        %s649 = smul.addr %s648, 4
        %s650 = smul.addr %s649, 8
        %s651 = scalar_lea.vmem %s8, %s650
      $region64: #{inverted_residual_forward.1} parent=59 // pred_fallthru
        _
    $region60: #{inverted_residual_forward.1} parent=5 // pred_fallthru
      _
  $region6: #{inverted_residual_forward.1} parent=0 // loop_footer
    %s18 = sadd.s32 1, %s14
  $region7: #{inverted_residual_forward.1} parent=0 // loop_footer_branch
    %13 = sbr.rel target = $region3
  $region8: #{inverted_residual_forward.1} parent=0 // loop_exit
    _

</llo_original>
